<compile_context>
chip_gen: v7x
topology: tpu7x:2x2x1
jax: 0.10.0
libtpu: 0.0.40
codegen_flags: <defaults>
</compile_context>

<pallas_src>
import functools

import jax
import jax.numpy as jnp
from jax.experimental import pallas as pl
from jax.experimental.pallas import tpu as pltpu


def _round_up(x, m):
    return ((x + m - 1) // m) * m


def _value_kernel(x_ref, w1_ref, b1_ref, w2_ref, b2_ref, w3_ref, b3_ref,
                  o_ref, *, activation):
    if activation == "tanh":
        act = jnp.tanh
    elif activation == "relu":
        act = lambda v: jnp.maximum(v, 0.0)
    elif activation == "sigmoid":
        act = jax.nn.sigmoid
    else:
        raise ValueError(f"unsupported activation: {activation}")

    # Matmul-operand dtype follows the (bf16 by default) weights; accumulation
    # and all elementwise work stay f32 (v5e has no bf16 VPU/EUP path).
    mm_dtype = w1_ref.dtype

    x = x_ref[...].astype(mm_dtype)

    # hidden layer 1: (block_b, state_dim) @ (state_dim, h1) on the MXU
    h = jnp.dot(x, w1_ref[...], preferred_element_type=jnp.float32)
    h = act(h + b1_ref[...])

    # hidden layer 2: (block_b, h1) @ (h1, h2) on the MXU
    h = jnp.dot(h.astype(mm_dtype), w2_ref[...],
                preferred_element_type=jnp.float32)
    h = act(h + b2_ref[...])

    # value head (out dim = 1): one narrow MXU matmul. Cheaper than an XLU
    # lane-reduce ladder, which would contend for the same vector-extended slot.
    v = jnp.dot(h.astype(mm_dtype), w3_ref[...],
                preferred_element_type=jnp.float32)
    o_ref[...] = (v + b3_ref[...]).astype(o_ref.dtype)


def _pick_block_b(B, state_dim, vmem_budget_bytes=16 << 20):
    """Batch-tile heuristic.

    - Small batches (B < 256): one grid step, whole batch in one tile.
    - Otherwise: largest tile from a descending candidate list whose estimated
      per-step VMEM footprint (double-buffered x/out blocks, lane-padded, plus
      f32 intermediates) fits the budget AND that leaves >=2 grid steps so
      v7x's two TensorCores both get work.
    """
    lanes_x = _round_up(max(state_dim, 128), 128)

    def est(bb):
        io = 2 * bb * lanes_x * 4 + 2 * bb * 128 * 4   # double-buffered x / out
        tmp = 3 * bb * 128 * 4                          # f32 hiddens + bf16 copies
        return io + tmp

    if B < 256:
        return B
    for cand in (8192, 4096, 2048, 1024, 512, 256, 128):
        if est(cand) <= vmem_budget_bytes and pl.cdiv(B, cand) >= 2:
            return cand
    return 128


def value_forward(x, params, *, activation="tanh", block_b=None,
                  use_bf16_matmul=True):
    """Run the Value MLP forward pass with a Pallas TPU kernel.

    x:      (B, state_dim) float32
    params: dict with w1 (state_dim, h1), b1 (1, h1), w2 (h1, h2), b2 (1, h2),
            w3 (h2, 1), b3 (1, 1)
    returns (B, 1) float32
    """
    B, state_dim = x.shape
    w1, b1 = params["w1"], params["b1"]
    w2, b2 = params["w2"], params["b2"]
    w3, b3 = params["w3"], params["b3"]
    h1 = w1.shape[1]
    h2 = w2.shape[1]

    if block_b is None:
        block_b = _pick_block_b(B, state_dim)

    # Non-divisible batches: zero-pad up to a tile multiple and slice after
    # (never fall back to one giant whole-batch tile).
    B_pad = _round_up(B, block_b)
    x_in = x if B_pad == B else jnp.pad(x, ((0, B_pad - B), (0, 0)))

    # Optionally (default) pre-cast matmul weights to bf16; biases stay f32.
    mm_dtype = jnp.bfloat16 if use_bf16_matmul else jnp.float32
    w1c = w1.astype(mm_dtype)
    w2c = w2.astype(mm_dtype)
    w3c = w3.astype(mm_dtype)
    b1r = b1.reshape(1, h1).astype(jnp.float32)
    b2r = b2.reshape(1, h2).astype(jnp.float32)
    b3r = b3.reshape(1, 1).astype(jnp.float32)

    kernel = functools.partial(_value_kernel, activation=activation)

    grid = (B_pad // block_b,)
    out = pl.pallas_call(
        kernel,
        out_shape=jax.ShapeDtypeStruct((B_pad, 1), jnp.float32),
        grid_spec=pltpu.PrefetchScalarGridSpec(
            num_scalar_prefetch=0,
            grid=grid,
            in_specs=[
                # batch tile of activations
                pl.BlockSpec((block_b, state_dim), lambda i: (i, 0)),
                # full weights / biases every iteration (small, ~50-100 KiB)
                pl.BlockSpec((state_dim, h1), lambda i: (0, 0)),
                pl.BlockSpec((1, h1), lambda i: (0, 0)),
                pl.BlockSpec((h1, h2), lambda i: (0, 0)),
                pl.BlockSpec((1, h2), lambda i: (0, 0)),
                pl.BlockSpec((h2, 1), lambda i: (0, 0)),
                pl.BlockSpec((1, 1), lambda i: (0, 0)),
            ],
            out_specs=pl.BlockSpec((block_b, 1), lambda i: (i, 0)),
        ),
        compiler_params=pltpu.CompilerParams(
            # "parallel" lets multi-step grids shard across v7x's two TCs.
            dimension_semantics=("parallel",),
            vmem_limit_bytes=32 << 20,
        ),
    )(x_in, w1c, b1r, w2c, b2r, w3c, b3r)

    if B_pad != B:
        out = out[:B]
    return out


def init_value_params(key, state_dim, hidden_size=(128, 128)):
    """Deterministic init mimicking nn.Linear defaults (uniform +-1/sqrt(fan_in)),
    with the value head weight scaled by 0.1 and its bias zeroed, exactly like
    the PyTorch __init__."""
    params = {}
    dims = [state_dim] + list(hidden_size)
    keys = jax.random.split(key, 2 * len(hidden_size) + 1)
    for li, (din, dout) in enumerate(zip(dims[:-1], dims[1:])):
        bound = 1.0 / jnp.sqrt(din)
        w = jax.random.uniform(keys[2 * li], (din, dout), jnp.float32,
                               -bound, bound)
        b = jax.random.uniform(keys[2 * li + 1], (1, dout), jnp.float32,
                               -bound, bound)
        params[f"w{li + 1}"] = w
        params[f"b{li + 1}"] = b
    # value head: Linear(last_hidden, 1), weight * 0.1, bias * 0.0
    din = dims[-1]
    bound = 1.0 / jnp.sqrt(din)
    w3 = jax.random.uniform(keys[-1], (din, 1), jnp.float32, -bound, bound)
    params["w3"] = w3 * 0.1
    params["b3"] = jnp.zeros((1, 1), jnp.float32)
    return params


def value_forward_ref(x, params, activation="tanh"):
    act = {"tanh": jnp.tanh,
           "relu": lambda v: jnp.maximum(v, 0.0),
           "sigmoid": jax.nn.sigmoid}[activation]
    h = act(x @ params["w1"] + params["b1"])
    h = act(h @ params["w2"] + params["b2"])
    return h @ params["w3"] + params["b3"]


if __name__ == "__main__":
    key = jax.random.PRNGKey(0)
    k_param, k_x1, k_x2, k_x3 = jax.random.split(key, 4)

    state_dim = 32
    hidden_size = (128, 128)
    params = init_value_params(k_param, state_dim, hidden_size)

    # --- Small batch: single grid step (block_b == B). ---
    x_small = jax.random.normal(k_x1, (16, state_dim), jnp.float32)
    ref_small = value_forward_ref(x_small, params, activation="tanh")

    out_bf16 = jax.block_until_ready(
        value_forward(x_small, params, activation="tanh"))          # bf16 default
    assert out_bf16.shape == (16, 1)
    assert jnp.allclose(out_bf16, ref_small, atol=5e-2, rtol=5e-2)

    out_f32 = jax.block_until_ready(
        value_forward(x_small, params, activation="tanh",
                      use_bf16_matmul=False))                       # f32 path
    assert jnp.allclose(out_f32, ref_small, atol=1e-5, rtol=1e-5)

    # --- Multi-tile grid path (explicit block_b, 2 grid steps). ---
    x_mid = jax.random.normal(k_x2, (256, state_dim), jnp.float32)
    ref_mid = value_forward_ref(x_mid, params, activation="tanh")

    out_mid_f32 = jax.block_until_ready(
        value_forward(x_mid, params, activation="tanh", block_b=128,
                      use_bf16_matmul=False))
    assert out_mid_f32.shape == (256, 1)
    assert jnp.allclose(out_mid_f32, ref_mid, atol=1e-5, rtol=1e-5)

    out_mid_bf16 = jax.block_until_ready(
        value_forward(x_mid, params, activation="tanh"))
    assert jnp.allclose(out_mid_bf16, ref_mid, atol=5e-2, rtol=5e-2)

    # --- Non-divisible batch: exercises the pad-and-slice path. ---
    x_rag = jax.random.normal(k_x3, (300, state_dim), jnp.float32)
    ref_rag = value_forward_ref(x_rag, params, activation="tanh")
    out_rag = jax.block_until_ready(
        value_forward(x_rag, params, activation="tanh"))
    assert out_rag.shape == (300, 1)
    assert jnp.allclose(out_rag, ref_rag, atol=5e-2, rtol=5e-2)

    print("KERNEL_OK")
</pallas_src>

<mosaic_0001>
module attributes {stable_mosaic.version = 11 : i64} {
  func.func @_value_kernel(%arg0: i32, %arg1: memref<16x32xf32, #tpu.memory_space<vmem>>, %arg2: memref<32x128xbf16, #tpu.memory_space<vmem>>, %arg3: memref<1x128xf32, #tpu.memory_space<vmem>>, %arg4: memref<128x128xbf16, #tpu.memory_space<vmem>>, %arg5: memref<1x128xf32, #tpu.memory_space<vmem>>, %arg6: memref<128x1xbf16, #tpu.memory_space<vmem>>, %arg7: memref<1x1xf32, #tpu.memory_space<vmem>>, %arg8: memref<16x1xf32, #tpu.memory_space<vmem>>) attributes {dimension_semantics = [#tpu.dimension_semantics<parallel>], iteration_bounds = array<i64: 1>, scalar_prefetch = 0 : i64, scratch_operands = 0 : i64, tpu.core_type = #tpu.core_type<tc>, window_params = [{transform_indices = @transform_0, window_bounds = array<i64: 16, 32>}, {pipeline_mode = #tpu.pipeline_mode<synchronous>, transform_indices = @transform_1, window_bounds = array<i64: 32, 128>}, {pipeline_mode = #tpu.pipeline_mode<synchronous>, transform_indices = @transform_2, window_bounds = array<i64: 1, 128>}, {pipeline_mode = #tpu.pipeline_mode<synchronous>, transform_indices = @transform_3, window_bounds = array<i64: 128, 128>}, {pipeline_mode = #tpu.pipeline_mode<synchronous>, transform_indices = @transform_4, window_bounds = array<i64: 1, 128>}, {pipeline_mode = #tpu.pipeline_mode<synchronous>, transform_indices = @transform_5, window_bounds = array<i64: 128, 1>}, {pipeline_mode = #tpu.pipeline_mode<synchronous>, transform_indices = @transform_6, window_bounds = array<i64: 1, 1>}, {transform_indices = @transform_7, window_bounds = array<i64: 16, 1>}]} {
    %c0 = arith.constant 0 : index
    %c0_0 = arith.constant 0 : index
    %0 = vector.load %arg1[%c0, %c0_0] : memref<16x32xf32, #tpu.memory_space<vmem>>, vector<16x32xf32>
    %1 = arith.truncf %0 : vector<16x32xf32> to vector<16x32xbf16>
    %c0_1 = arith.constant 0 : index
    %c0_2 = arith.constant 0 : index
    %2 = vector.load %arg2[%c0_1, %c0_2] : memref<32x128xbf16, #tpu.memory_space<vmem>>, vector<32x128xbf16>
    %cst = arith.constant dense<0.000000e+00> : vector<16x128xf32>
    %3 = tpu.matmul %1, %2, %cst {dimension_numbers = #tpu.dot_dimension_numbers<[1], [0], [0], [1], [0, 0, 1, 1], [], []>} : vector<16x32xbf16>, vector<32x128xbf16>, vector<16x128xf32> -> vector<16x128xf32>
    %c0_3 = arith.constant 0 : index
    %c0_4 = arith.constant 0 : index
    %4 = vector.load %arg3[%c0_3, %c0_4] : memref<1x128xf32, #tpu.memory_space<vmem>>, vector<1x128xf32>
    %5 = vector.broadcast %4 : vector<1x128xf32> to vector<16x128xf32>
    %6 = arith.addf %3, %5 : vector<16x128xf32>
    %7 = math.tanh %6 : vector<16x128xf32>
    %8 = arith.truncf %7 : vector<16x128xf32> to vector<16x128xbf16>
    %c0_5 = arith.constant 0 : index
    %c0_6 = arith.constant 0 : index
    %9 = vector.load %arg4[%c0_5, %c0_6] : memref<128x128xbf16, #tpu.memory_space<vmem>>, vector<128x128xbf16>
    %cst_7 = arith.constant dense<0.000000e+00> : vector<16x128xf32>
    %10 = tpu.matmul %8, %9, %cst_7 {dimension_numbers = #tpu.dot_dimension_numbers<[1], [0], [0], [1], [0, 0, 1, 1], [], []>} : vector<16x128xbf16>, vector<128x128xbf16>, vector<16x128xf32> -> vector<16x128xf32>
    %c0_8 = arith.constant 0 : index
    %c0_9 = arith.constant 0 : index
    %11 = vector.load %arg5[%c0_8, %c0_9] : memref<1x128xf32, #tpu.memory_space<vmem>>, vector<1x128xf32>
    %12 = vector.broadcast %11 : vector<1x128xf32> to vector<16x128xf32>
    %13 = arith.addf %10, %12 : vector<16x128xf32>
    %14 = math.tanh %13 : vector<16x128xf32>
    %15 = arith.truncf %14 : vector<16x128xf32> to vector<16x128xbf16>
    %c0_10 = arith.constant 0 : index
    %c0_11 = arith.constant 0 : index
    %16 = vector.load %arg6[%c0_10, %c0_11] : memref<128x1xbf16, #tpu.memory_space<vmem>>, vector<128x1xbf16>
    %cst_12 = arith.constant dense<0.000000e+00> : vector<16x1xf32>
    %17 = tpu.matmul %15, %16, %cst_12 {dimension_numbers = #tpu.dot_dimension_numbers<[1], [0], [0], [1], [0, 0, 1, 1], [], []>} : vector<16x128xbf16>, vector<128x1xbf16>, vector<16x1xf32> -> vector<16x1xf32>
    %c0_13 = arith.constant 0 : index
    %c0_14 = arith.constant 0 : index
    %18 = vector.load %arg7[%c0_13, %c0_14] : memref<1x1xf32, #tpu.memory_space<vmem>>, vector<1x1xf32>
    %19 = vector.broadcast %18 : vector<1x1xf32> to vector<16x1xf32>
    %20 = arith.addf %17, %19 : vector<16x1xf32>
    %c0_15 = arith.constant 0 : index
    %c0_16 = arith.constant 0 : index
    %21 = vector.load %arg8[%c0_15, %c0_16] : memref<16x1xf32, #tpu.memory_space<vmem>>, vector<16x1xf32>
    tpu.vector_store %arg8[%c0_15, %c0_16], %20 {strides = array<i32>} : memref<16x1xf32, #tpu.memory_space<vmem>>, vector<16x1xf32>,
    return
  }
  func.func @transform_0(%arg0: i32) -> (i32, i32) {
    %c0_i32 = arith.constant 0 : i32
    %c0_i32_0 = arith.constant 0 : i32
    return %arg0, %c0_i32 : i32, i32
  }
  func.func @transform_1(%arg0: i32) -> (i32, i32) {
    %c0_i32 = arith.constant 0 : i32
    %c0_i32_0 = arith.constant 0 : i32
    %c0_i32_1 = arith.constant 0 : i32
    return %c0_i32, %c0_i32_0 : i32, i32
  }
  func.func @transform_2(%arg0: i32) -> (i32, i32) {
    %c0_i32 = arith.constant 0 : i32
    %c0_i32_0 = arith.constant 0 : i32
    %c0_i32_1 = arith.constant 0 : i32
    return %c0_i32, %c0_i32_0 : i32, i32
  }
  func.func @transform_3(%arg0: i32) -> (i32, i32) {
    %c0_i32 = arith.constant 0 : i32
    %c0_i32_0 = arith.constant 0 : i32
    %c0_i32_1 = arith.constant 0 : i32
    return %c0_i32, %c0_i32_0 : i32, i32
  }
  func.func @transform_4(%arg0: i32) -> (i32, i32) {
    %c0_i32 = arith.constant 0 : i32
    %c0_i32_0 = arith.constant 0 : i32
    %c0_i32_1 = arith.constant 0 : i32
    return %c0_i32, %c0_i32_0 : i32, i32
  }
  func.func @transform_5(%arg0: i32) -> (i32, i32) {
    %c0_i32 = arith.constant 0 : i32
    %c0_i32_0 = arith.constant 0 : i32
    %c0_i32_1 = arith.constant 0 : i32
    return %c0_i32, %c0_i32_0 : i32, i32
  }
  func.func @transform_6(%arg0: i32) -> (i32, i32) {
    %c0_i32 = arith.constant 0 : i32
    %c0_i32_0 = arith.constant 0 : i32
    %c0_i32_1 = arith.constant 0 : i32
    return %c0_i32, %c0_i32_0 : i32, i32
  }
  func.func @transform_7(%arg0: i32) -> (i32, i32) {
    %c0_i32 = arith.constant 0 : i32
    %c0_i32_0 = arith.constant 0 : i32
    return %arg0, %c0_i32 : i32, i32
  }
}

</mosaic_0001>

<llo_original>
// kernel: tpu_custom_call.1
$region0: #{tpu_custom_call.1}
  #allocation0 [shape = 'u32[]', space=smem, size = 0x4, offset = 0x4, fixed_abs, tag = 'smem constant byte address 0x4 - core index']
  #allocation1 [shape = 'u32[144,128]{1,0:T(1,128)}', space=vmem, size = 0x12000, scoped, tag = 'internal scratch']
  #allocation2 [shape = 'f32[1,1]{1,0:T(1,128)S(1)}', space=vmem, size = 0x200, scoped, tag = 'scoped memory for tpu_custom_call.1']
  %s0 = inlined_call_operand.vmem [shape: f32[16,32], index: 0, kind: input, shape index: {}]
  %s1 = inlined_call_operand.hbm [shape: bf16[32,128], index: 1, kind: input, shape index: {}]
  %s2 = inlined_call_operand.hbm [shape: f32[1,128], index: 2, kind: input, shape index: {}]
  %s3 = inlined_call_operand.vmem [shape: bf16[128,128], index: 3, kind: input, shape index: {}]
  %s4 = inlined_call_operand.vmem [shape: f32[1,128], index: 4, kind: input, shape index: {}]
  %s5 = inlined_call_operand.vmem [shape: bf16[128,1], index: 5, kind: input, shape index: {}]
  %s6 = inlined_call_operand.<no memory space> [shape: f32[1,1], index: 6, kind: input, shape index: {}]
  %s7 = inlined_call_operand.vmem [shape: f32[16,1], index: 7, kind: output, shape index: {}]
  %s8 = sld [smem:[#allocation0]]
  $region46: #{tpu_custom_call.1} parent=0
    _
  %s10 = ssub.s32 1, %s8
  %s11 = scalar_select 0, %s10, %s8
  %v12 = vstv %s6
  %13 = vst [vmem:[#allocation2] sm:$0x1] %v12
  $region1: #{tpu_custom_call.1} parent=0
    #allocation3 [shape = 'u8[8192]{0}', space=vmem, size = 0x2000, scoped, tag = 'input window, operand 1, single buffered']
    #allocation4 [shape = 's32[1]{0}', space=sflag, size = 0x4, scoped, tag = 'scoped memory for tpu_custom_call.1']
    #allocation5 [shape = 'u8[512]{0}', space=vmem, size = 0x400, scoped, tag = 'input window, operand 2, single buffered']
    #allocation6 [shape = 's32[1]{0}', space=sflag, size = 0x4, scoped, tag = 'scoped memory for tpu_custom_call.1']
    %14 = vsyncpa [#allocation4], 0
    %15 = vsyncpa [#allocation6], 0
    // Predicated region
    $region2: #{tpu_custom_call.1} parent=1 // pred_check
      _
    $region3: #{tpu_custom_call.1} parent=1 // pred_check_branch
      %17 = sbr.rel (0) target = $region5
    $region4: #{tpu_custom_call.1} parent=1 // pred_region
      _
    $region5: #{tpu_custom_call.1} parent=1 // pred_fallthru
      _
    // Predicated region
    $region6: #{tpu_custom_call.1} parent=1 // pred_check
      _
    $region7: #{tpu_custom_call.1} parent=1 // pred_check_branch
      %19 = sbr.rel (0) target = $region9
    $region8: #{tpu_custom_call.1} parent=1 // pred_region
      %s21 = ssub.s32 256, 256
      %22 = vsyncadd [#allocation4], %s21
      %s23 = sshll.u32 [#allocation3], 4
      %s24 = int_to_ptr.vmem [resolvable:$true] %s23
      %29 = dma.hbm_to_vmem [thread:$0]  %s1, 256, %s24, [#allocation4], 64, 64, 4
    $region9: #{tpu_custom_call.1} parent=1 // pred_fallthru
      _
    // Predicated region
    $region10: #{tpu_custom_call.1} parent=1 // pred_check
      _
    $region11: #{tpu_custom_call.1} parent=1 // pred_check_branch
      %31 = sbr.rel (0) target = $region13
    $region12: #{tpu_custom_call.1} parent=1 // pred_region
      %s33 = ssub.s32 16, 16
      %34 = vsyncadd [#allocation6], %s33
      %s36 = sshll.u32 [#allocation5], 4
      %s37 = int_to_ptr.vmem [resolvable:$true] %s36
      %39 = dma.hbm_to_vmem [thread:$0]  %s2, 16, %s37, [#allocation6]
    $region13: #{tpu_custom_call.1} parent=1 // pred_fallthru
      _
    // Predicated region
    $region14: #{tpu_custom_call.1} parent=1 // pred_check
      _
    $region15: #{tpu_custom_call.1} parent=1 // pred_check_branch
      %41 = sbr.rel (0) target = $region17
    $region16: #{tpu_custom_call.1} parent=1 // pred_region
      _
    $region17: #{tpu_custom_call.1} parent=1 // pred_fallthru
      _
    // Predicated region
    $region18: #{tpu_custom_call.1} parent=1 // pred_check
      _
    $region19: #{tpu_custom_call.1} parent=1 // pred_check_branch
      %43 = sbr.rel (0) target = $region21
    $region20: #{tpu_custom_call.1} parent=1 // pred_region
      _
    $region21: #{tpu_custom_call.1} parent=1 // pred_fallthru
      _
    // Predicated region
    $region22: #{tpu_custom_call.1} parent=1 // pred_check
      _
    $region23: #{tpu_custom_call.1} parent=1 // pred_check_branch
      %45 = sbr.rel (0) target = $region25
    $region24: #{tpu_custom_call.1} parent=1 // pred_region
      _
    $region25: #{tpu_custom_call.1} parent=1 // pred_fallthru
      _
    // Predicated region
    $region26: #{tpu_custom_call.1} parent=1 // pred_check
      _
    $region27: #{tpu_custom_call.1} parent=1 // pred_check_branch
      %47 = sbr.rel (0) target = $region29
    $region28: #{tpu_custom_call.1} parent=1 // pred_region
      _
    $region29: #{tpu_custom_call.1} parent=1 // pred_fallthru
      _
    // Predicated region
    $region30: #{tpu_custom_call.1} parent=1 // pred_check
      _
    $region31: #{tpu_custom_call.1} parent=1 // pred_check_branch
      %49 = sbr.rel (0) target = $region33
    $region32: #{tpu_custom_call.1} parent=1 // pred_region
      %50 = dma.done [#allocation4], 256
    $region33: #{tpu_custom_call.1} parent=1 // pred_fallthru
      _
    // Predicated region
    $region34: #{tpu_custom_call.1} parent=1 // pred_check
      _
    $region35: #{tpu_custom_call.1} parent=1 // pred_check_branch
      %52 = sbr.rel (0) target = $region37
    $region36: #{tpu_custom_call.1} parent=1 // pred_region
      %53 = dma.done [#allocation6], 16
    $region37: #{tpu_custom_call.1} parent=1 // pred_fallthru
      _
    %v55 = vld [vmem:[%s0] sm:$0xff]
    %v56 = vld [vmem:[%s0 + $0x8] sm:$0xff]
    %v57 = vpack.c.bf16 %v56, %v55
    %v58 = vld [vmem:[#allocation3] sm:$0xf]
    %v59 = vld [vmem:[#allocation3 + $0x4] sm:$0xf]
    %v60 = vld [vmem:[#allocation3 + $0x8] sm:$0xf]
    %v61 = vld [vmem:[#allocation3 + $0xc] sm:$0xf]
    %v62 = vld [vmem:[#allocation5] sm:$0x1]
    %v64 = vlaneseq
    %v65 = vshrl.u32 %v64, 7
    %v66 = vsub.s32 0, %v65
    %v67 = vrot.slane %v62, %v66
    %v73 = vunpack.c.l.b16 %v58
    %v74 = vunpack.c.l.b16 %v59
    %v75 = vunpack.c.l.b16 %v60
    %v76 = vunpack.c.l.b16 %v61
    %v77 = vpack.c.b16 %v74, %v73
    %v78 = vpack.c.b16 %v76, %v75
    %vm81 = vcmask 261120
    %v83 = vsel %vm81, %v57, 0
    %85 = vmatprep.subr.bf16.mxu0 0
    %86 = vmatpush1.bf16.msra.mxu0 %v77
    %87 = vmatprep.subr.bf16.mxu0 0
    %88 = vmatpush1.bf16.msra.mxu0 %v78
    %89 = vmatprep.subr.bf16.mxu0 0
    %90 = vmatpush1.bf16.msra.mxu0 0
    %91 = vmatprep.subr.bf16.mxu0 0
    %92 = vmatpush1.bf16.msra.mxu0 0
    %93 = vmatprep.subr.bf16.mxu0 0
    %94 = vmatpush1.bf16.msra.mxu0 0
    %95 = vmatprep.subr.bf16.mxu0 0
    %96 = vmatpush1.bf16.msra.mxu0 0
    %97 = vmatprep.subr.bf16.mxu0 0
    %98 = vmatpush1.bf16.msra.mxu0 0
    %99 = vmatprep.subr.bf16.mxu0 0
    %100 = vmatpush1.bf16.msra.mxu0 0
    %101 = vmatprep.subr.bf16.mxu0 0
    %102 = vmatpush1.bf16.msra.mxu0 0
    %103 = vmatprep.subr.bf16.mxu0 0
    %104 = vmatpush1.bf16.msra.mxu0 0
    %105 = vmatprep.subr.bf16.mxu0 0
    %106 = vmatpush1.bf16.msra.mxu0 0
    %107 = vmatprep.subr.bf16.mxu0 0
    %108 = vmatpush1.bf16.msra.mxu0 0
    %109 = vmatprep.subr.bf16.mxu0 0
    %110 = vmatpush1.bf16.msra.mxu0 0
    %111 = vmatprep.subr.bf16.mxu0 0
    %112 = vmatpush1.bf16.msra.mxu0 0
    %113 = vmatprep.subr.bf16.mxu0 0
    %114 = vmatpush1.bf16.msra.mxu0 0
    %115 = vmatprep.subr.bf16.mxu0 0
    %116 = vmatpush1.bf16.msra.mxu0 0
    %117 = vmatprep.mubr.bf16.mxu0 0
    %118 = vmatmul.mubr.bf16.gmra.mrb[0].mxu0 %v83
    %v119 = vpop.f32.mrb[0].mxu0
    %v120 = vadd.f32 %v67, %v119
    %v121 = vpop.f32.mrb[0].mxu0
    %v122 = vpop.f32.mrb[0].mxu0
    %v123 = vadd.f32 %v67, %v122
    %v124 = vpop.f32.mrb[0].mxu0
    %125 = vdwg.mxu0
    %v126 = vtanh.pop %v120
    %v127 = vtanh.pop %v123
    %v128 = vpack.c.bf16 %v127, %v126
    %v129 = vld [vmem:[%s3] sm:$0xf]
    %v130 = vld [vmem:[%s3 + $0x4] sm:$0xf]
    %v131 = vld [vmem:[%s3 + $0x8] sm:$0xf]
    %v132 = vld [vmem:[%s3 + $0xc] sm:$0xf]
    %v133 = vld [vmem:[%s3 + $0x10] sm:$0xf]
    %v134 = vld [vmem:[%s3 + $0x14] sm:$0xf]
    %v135 = vld [vmem:[%s3 + $0x18] sm:$0xf]
    %v136 = vld [vmem:[%s3 + $0x1c] sm:$0xf]
    %v137 = vld [vmem:[%s3 + $0x20] sm:$0xf]
    %v138 = vld [vmem:[%s3 + $0x24] sm:$0xf]
    %v139 = vld [vmem:[%s3 + $0x28] sm:$0xf]
    %v140 = vld [vmem:[%s3 + $0x2c] sm:$0xf]
    %v141 = vld [vmem:[%s3 + $0x30] sm:$0xf]
    %v142 = vld [vmem:[%s3 + $0x34] sm:$0xf]
    %v143 = vld [vmem:[%s3 + $0x38] sm:$0xf]
    %v144 = vld [vmem:[%s3 + $0x3c] sm:$0xf]
    %v145 = vld [vmem:[%s4] sm:$0x1]
    %v147 = vlaneseq
    %v148 = vshrl.u32 %v147, 7
    %v149 = vsub.s32 0, %v148
    %v150 = vrot.slane %v145, %v149
    %v168 = vunpack.c.l.b16 %v129
    %v169 = vunpack.c.l.b16 %v130
    %v170 = vunpack.c.l.b16 %v131
    %v171 = vunpack.c.l.b16 %v132
    %v172 = vunpack.c.l.b16 %v133
    %v173 = vunpack.c.l.b16 %v134
    %v174 = vunpack.c.l.b16 %v135
    %v175 = vunpack.c.l.b16 %v136
    %v176 = vunpack.c.l.b16 %v137
    %v177 = vunpack.c.l.b16 %v138
    %v178 = vunpack.c.l.b16 %v139
    %v179 = vunpack.c.l.b16 %v140
    %v180 = vunpack.c.l.b16 %v141
    %v181 = vunpack.c.l.b16 %v142
    %v182 = vunpack.c.l.b16 %v143
    %v183 = vunpack.c.l.b16 %v144
    %v184 = vpack.c.b16 %v169, %v168
    %v185 = vpack.c.b16 %v171, %v170
    %v186 = vpack.c.b16 %v173, %v172
    %v187 = vpack.c.b16 %v175, %v174
    %v188 = vpack.c.b16 %v177, %v176
    %v189 = vpack.c.b16 %v179, %v178
    %v190 = vpack.c.b16 %v181, %v180
    %v191 = vpack.c.b16 %v183, %v182
    %200 = vmatprep.subr.bf16.mxu0 0
    %201 = vmatpush1.bf16.msra.mxu0 %v184
    %202 = vmatprep.subr.bf16.mxu0 0
    %203 = vmatpush1.bf16.msra.mxu0 %v185
    %204 = vmatprep.subr.bf16.mxu0 0
    %205 = vmatpush1.bf16.msra.mxu0 %v186
    %206 = vmatprep.subr.bf16.mxu0 0
    %207 = vmatpush1.bf16.msra.mxu0 %v187
    %208 = vmatprep.subr.bf16.mxu0 0
    %209 = vmatpush1.bf16.msra.mxu0 %v188
    %210 = vmatprep.subr.bf16.mxu0 0
    %211 = vmatpush1.bf16.msra.mxu0 %v189
    %212 = vmatprep.subr.bf16.mxu0 0
    %213 = vmatpush1.bf16.msra.mxu0 %v190
    %214 = vmatprep.subr.bf16.mxu0 0
    %215 = vmatpush1.bf16.msra.mxu0 %v191
    %216 = vmatprep.subr.bf16.mxu0 0
    %217 = vmatpush1.bf16.msra.mxu0 0
    %218 = vmatprep.subr.bf16.mxu0 0
    %219 = vmatpush1.bf16.msra.mxu0 0
    %220 = vmatprep.subr.bf16.mxu0 0
    %221 = vmatpush1.bf16.msra.mxu0 0
    %222 = vmatprep.subr.bf16.mxu0 0
    %223 = vmatpush1.bf16.msra.mxu0 0
    %224 = vmatprep.subr.bf16.mxu0 0
    %225 = vmatpush1.bf16.msra.mxu0 0
    %226 = vmatprep.subr.bf16.mxu0 0
    %227 = vmatpush1.bf16.msra.mxu0 0
    %228 = vmatprep.subr.bf16.mxu0 0
    %229 = vmatpush1.bf16.msra.mxu0 0
    %230 = vmatprep.subr.bf16.mxu0 0
    %231 = vmatpush1.bf16.msra.mxu0 0
    %232 = vmatprep.mubr.bf16.mxu0 0
    %233 = vmatmul.mubr.bf16.gmra.mrb[0].mxu0 %v128
    %v234 = vpop.f32.mrb[0].mxu0
    %v235 = vadd.f32 %v150, %v234
    %v236 = vpop.f32.mrb[0].mxu0
    %v237 = vpop.f32.mrb[0].mxu0
    %v238 = vadd.f32 %v150, %v237
    %v239 = vpop.f32.mrb[0].mxu0
    %240 = vdwg.mxu0
    %v241 = vtanh.pop %v235
    %v242 = vtanh.pop %v238
    %v243 = vpack.c.bf16 %v242, %v241
    %v244 = vld [vmem:[%s5] sm:$0xf]
    %v245 = vld [vmem:[%s5 + $0x4] sm:$0xf]
    %v246 = vld [vmem:[%s5 + $0x8] sm:$0xf]
    %v247 = vld [vmem:[%s5 + $0xc] sm:$0xf]
    %v248 = vld [vmem:[%s5 + $0x10] sm:$0xf]
    %v249 = vld [vmem:[%s5 + $0x14] sm:$0xf]
    %v250 = vld [vmem:[%s5 + $0x18] sm:$0xf]
    %v251 = vld [vmem:[%s5 + $0x1c] sm:$0xf]
    %v252 = vld [vmem:[%s5 + $0x20] sm:$0xf]
    %v253 = vld [vmem:[%s5 + $0x24] sm:$0xf]
    %v254 = vld [vmem:[%s5 + $0x28] sm:$0xf]
    %v255 = vld [vmem:[%s5 + $0x2c] sm:$0xf]
    %v256 = vld [vmem:[%s5 + $0x30] sm:$0xf]
    %v257 = vld [vmem:[%s5 + $0x34] sm:$0xf]
    %v258 = vld [vmem:[%s5 + $0x38] sm:$0xf]
    %v259 = vld [vmem:[%s5 + $0x3c] sm:$0xf]
    %v260 = vld [vmem:[#allocation2] sm:$0x1]
    %v262 = vlaneseq
    %v263 = vshrl.u32 %v262, 7
    %v264 = vsub.s32 0, %v263
    %v265 = vrot.slane %v260, %v264
    %v283 = vunpack.c.l.b16 %v244
    %v284 = vunpack.c.l.b16 %v245
    %v285 = vunpack.c.l.b16 %v246
    %v286 = vunpack.c.l.b16 %v247
    %v287 = vunpack.c.l.b16 %v248
    %v288 = vunpack.c.l.b16 %v249
    %v289 = vunpack.c.l.b16 %v250
    %v290 = vunpack.c.l.b16 %v251
    %v291 = vunpack.c.l.b16 %v252
    %v292 = vunpack.c.l.b16 %v253
    %v293 = vunpack.c.l.b16 %v254
    %v294 = vunpack.c.l.b16 %v255
    %v295 = vunpack.c.l.b16 %v256
    %v296 = vunpack.c.l.b16 %v257
    %v297 = vunpack.c.l.b16 %v258
    %v298 = vunpack.c.l.b16 %v259
    %v299 = vpack.c.b16 %v284, %v283
    %v300 = vpack.c.b16 %v286, %v285
    %v301 = vpack.c.b16 %v288, %v287
    %v302 = vpack.c.b16 %v290, %v289
    %v303 = vpack.c.b16 %v292, %v291
    %v304 = vpack.c.b16 %v294, %v293
    %v305 = vpack.c.b16 %v296, %v295
    %v306 = vpack.c.b16 %v298, %v297
    %315 = vmatprep.subr.bf16.mxu0 0
    %316 = vmatpush1.bf16.msra.mxu0 %v299
    %317 = vmatprep.subr.bf16.mxu0 0
    %318 = vmatpush1.bf16.msra.mxu0 %v300
    %319 = vmatprep.subr.bf16.mxu0 0
    %320 = vmatpush1.bf16.msra.mxu0 %v301
    %321 = vmatprep.subr.bf16.mxu0 0
    %322 = vmatpush1.bf16.msra.mxu0 %v302
    %323 = vmatprep.subr.bf16.mxu0 0
    %324 = vmatpush1.bf16.msra.mxu0 %v303
    %325 = vmatprep.subr.bf16.mxu0 0
    %326 = vmatpush1.bf16.msra.mxu0 %v304
    %327 = vmatprep.subr.bf16.mxu0 0
    %328 = vmatpush1.bf16.msra.mxu0 %v305
    %329 = vmatprep.subr.bf16.mxu0 0
    %330 = vmatpush1.bf16.msra.mxu0 %v306
    %331 = vmatprep.subr.bf16.mxu0 0
    %332 = vmatpush1.bf16.msra.mxu0 0
    %333 = vmatprep.subr.bf16.mxu0 0
    %334 = vmatpush1.bf16.msra.mxu0 0
    %335 = vmatprep.subr.bf16.mxu0 0
    %336 = vmatpush1.bf16.msra.mxu0 0
    %337 = vmatprep.subr.bf16.mxu0 0
    %338 = vmatpush1.bf16.msra.mxu0 0
    %339 = vmatprep.subr.bf16.mxu0 0
    %340 = vmatpush1.bf16.msra.mxu0 0
    %341 = vmatprep.subr.bf16.mxu0 0
    %342 = vmatpush1.bf16.msra.mxu0 0
    %343 = vmatprep.subr.bf16.mxu0 0
    %344 = vmatpush1.bf16.msra.mxu0 0
    %345 = vmatprep.subr.bf16.mxu0 0
    %346 = vmatpush1.bf16.msra.mxu0 0
    %347 = vmatprep.mubr.bf16.mxu0 0
    %348 = vmatmul.mubr.bf16.gmra.mrb[0].mxu0 %v243
    %v349 = vpop.f32.mrb[0].mxu0
    %v350 = vadd.f32 %v265, %v349
    %v351 = vpop.f32.mrb[0].mxu0
    %v352 = vpop.f32.mrb[0].mxu0
    %v353 = vadd.f32 %v265, %v352
    %v354 = vpop.f32.mrb[0].mxu0
    %355 = vdwg.mxu0
    %vm356 = vcmask 7168
    %357 = vst.msk [vmem:[%s7] sm:$0xff] %vm356, %v350
    %358 = vst.msk [vmem:[%s7 + $0x8] sm:$0xff] %vm356, %v353
    // Predicated region
    $region38: #{tpu_custom_call.1} parent=1 // pred_check
      _
    $region39: #{tpu_custom_call.1} parent=1 // pred_check_branch
      %360 = sbr.rel (0) target = $region41
    $region40: #{tpu_custom_call.1} parent=1 // pred_region
      _
    $region41: #{tpu_custom_call.1} parent=1 // pred_fallthru
      _
    // Predicated region
    $region42: #{tpu_custom_call.1} parent=1 // pred_check
      _
    $region43: #{tpu_custom_call.1} parent=1 // pred_check_branch
      %362 = sbr.rel (0) target = $region45
    $region44: #{tpu_custom_call.1} parent=1 // pred_region
      _
    $region45: #{tpu_custom_call.1} parent=1 // pred_fallthru
      _
    %363 = vsyncpa [#allocation4], 1
    %364 = vsyncpa [#allocation6], 1

</llo_original>
